<compile_context>
chip_gen: v7x
topology: tpu7x:2x2x1
jax: 0.10.0
libtpu: 0.0.40
codegen_flags: <defaults>
</compile_context>

<pallas_src>
import math

import jax
import jax.numpy as jnp
from jax.experimental import pallas as pl
from jax.experimental.pallas import tpu as pltpu


def _round_up(x, m):
    return ((x + m - 1) // m) * m


def _make_kernel(n0p, n1p):
    """n0p / n1p: padded per-branch widths of highway layer 0 / 1 (128-multiples)."""

    def kernel(x_ref, w0_ref, b0_ref, w1_ref, b1_ref, wfc_ref, bfc_ref,
               o_ref, acc_ref):
        k = pl.program_id(1)

        @pl.when(k == 0)
        def _():
            acc_ref[...] = jnp.zeros_like(acc_ref)

        # Layer-0 partial product: bf16 x bf16 -> f32 accumulate on the MXU.
        acc_ref[...] += jnp.dot(x_ref[...], w0_ref[...],
                                preferred_element_type=jnp.float32)

        @pl.when(k == pl.num_programs(1) - 1)
        def _():
            def highway_combine(z, width):
                gate = jax.nn.sigmoid(z[:, :width])
                nonlinear = jnp.tanh(z[:, width:2 * width])   # f = torch.tanh
                linear = z[:, 2 * width:3 * width]
                # == gate*nonlinear + (1-gate)*linear, one fewer VPU mul/sub
                return linear + gate * (nonlinear - linear)

            z0 = acc_ref[...] + b0_ref[...]
            h0 = highway_combine(z0, n0p)

            z1 = jnp.dot(h0.astype(w1_ref.dtype), w1_ref[...],
                         preferred_element_type=jnp.float32) + b1_ref[...]
            h1 = highway_combine(z1, n1p)

            # TODO(synk): nn.Dropout is identity at inference time; not applied.
            logit = jnp.dot(h1.astype(wfc_ref.dtype), wfc_ref[...],
                            preferred_element_type=jnp.float32) + bfc_ref[...]
            o_ref[...] = logit.astype(o_ref.dtype)

    return kernel


def _linear_params(key, fan_in, fan_out):
    """PyTorch nn.Linear default init: U(-1/sqrt(in)); W stored as [in, out], b [1, out]."""
    kw, kb = jax.random.split(key)
    bound = 1.0 / math.sqrt(fan_in)
    w = jax.random.uniform(kw, (fan_in, fan_out), jnp.float32, -bound, bound)
    b = jax.random.uniform(kb, (1, fan_out), jnp.float32, -bound, bound)
    return w, b


def init_params(key, vocab_size, hidden_size, sent_len):
    # nlayers=2 (default) -> sizes = [hidden*sent_len, hidden*2, hidden, hidden]
    sizes = [hidden_size * sent_len, hidden_size * 2, hidden_size, hidden_size]
    keys = jax.random.split(key, 8)
    params = {}
    params["embed"] = jax.random.normal(keys[0], (vocab_size, hidden_size), jnp.float32)
    params["wg0"], params["bg0"] = _linear_params(keys[1], sizes[0], sizes[1])
    params["wn0"], params["bn0"] = _linear_params(keys[2], sizes[0], sizes[1])
    params["wl0"], params["bl0"] = _linear_params(keys[3], sizes[0], sizes[1])
    params["wg1"], params["bg1"] = _linear_params(keys[4], sizes[1], sizes[2])
    params["wn1"], params["bn1"] = _linear_params(keys[5], sizes[1], sizes[2])
    params["wl1"], params["bl1"] = _linear_params(keys[6], sizes[1], sizes[2])
    params["wfc"], params["bfc"] = _linear_params(keys[7], hidden_size, hidden_size)
    return params


def _pad2(a, rows, cols):
    return jnp.pad(a, ((0, rows - a.shape[0]), (0, cols - a.shape[1])))


def _pack_params(params):
    """Concat (gate|nonlinear|linear) per layer, zero-pad all matmul dims to 128
    multiples; weights -> bf16, biases stay f32."""
    k0 = params["wg0"].shape[0]          # hidden * sent_len
    n0 = params["wg0"].shape[1]          # 2 * hidden
    n1 = params["wg1"].shape[1]          # hidden
    c = params["wfc"].shape[1]           # class_num (= hidden)

    k0p = _round_up(k0, 128)
    n0p = _round_up(n0, 128)
    n1p = _round_up(n1, 128)
    cp = _round_up(c, 128)

    def cat3(g, n, l, rows, cols):
        return jnp.concatenate(
            [_pad2(g, rows, cols), _pad2(n, rows, cols), _pad2(l, rows, cols)], axis=1)

    w0 = cat3(params["wg0"], params["wn0"], params["wl0"], k0p, n0p).astype(jnp.bfloat16)
    b0 = cat3(params["bg0"], params["bn0"], params["bl0"], 1, n0p).astype(jnp.float32)
    w1 = cat3(params["wg1"], params["wn1"], params["wl1"], n0p, n1p).astype(jnp.bfloat16)
    b1 = cat3(params["bg1"], params["bn1"], params["bl1"], 1, n1p).astype(jnp.float32)
    wfc = _pad2(params["wfc"], n1p, cp).astype(jnp.bfloat16)
    bfc = _pad2(params["bfc"], 1, cp).astype(jnp.float32)

    dims = dict(k0=k0, k0p=k0p, n0p=n0p, n1p=n1p, c=c, cp=cp)
    return (w0, b0, w1, b1, wfc, bfc), dims


def _block_bytes(shape, dtype):
    n = 1
    for s in shape:
        n *= s
    return n * jnp.dtype(dtype).itemsize


def highway_text_forward(tokens, params):
    # Embedding gather + flatten kept as plain-JAX glue.
    # TODO(synk): could be fused in-kernel via PrefetchScalarGridSpec + pl.Element
    # row gather to save one HBM round-trip of the [B, S*D] activation.
    emb = params["embed"][tokens]                      # [B, S, D]
    B = emb.shape[0]
    x = emb.reshape(B, emb.shape[1] * emb.shape[2])    # [B, S*D]

    (w0, b0, w1, b1, wfc, bfc), d = _pack_params(params)
    k0p, n0p, n1p, c, cp = d["k0p"], d["n0p"], d["n1p"], d["c"], d["cp"]
    n0cat, n1cat = 3 * n0p, 3 * n1p

    # Batch tile (sublanes) and layer-0 reduction tile (lanes of x).
    tb = 128 if B >= 128 else _round_up(B, 16)
    b_pad = _round_up(B, tb)
    tk = min(k0p, 2048)
    while k0p % tk:
        tk -= 128
    nb, nk = b_pad // tb, k0p // tk

    x_p = _pad2(x, b_pad, k0p).astype(jnp.bfloat16)

    in_specs = [
        pl.BlockSpec((tb, tk), lambda i, k: (i, k)),        # x: stream batch/K tiles
        pl.BlockSpec((tk, n0cat), lambda i, k: (k, 0)),     # layer-0 weight K-slices
        pl.BlockSpec((1, n0cat), lambda i, k: (0, 0)),      # resident biases / weights
        pl.BlockSpec((n0p, n1cat), lambda i, k: (0, 0)),
        pl.BlockSpec((1, n1cat), lambda i, k: (0, 0)),
        pl.BlockSpec((n1p, cp), lambda i, k: (0, 0)),
        pl.BlockSpec((1, cp), lambda i, k: (0, 0)),
    ]
    out_spec = pl.BlockSpec((tb, cp), lambda i, k: (i, 0))

    # VMEM budget: double-buffered blocks + f32 accumulator, with margin.
    resident = 2 * (_block_bytes((tb, tk), jnp.bfloat16)
                    + _block_bytes((tk, n0cat), jnp.bfloat16)
                    + _block_bytes((1, n0cat), jnp.float32)
                    + _block_bytes((n0p, n1cat), jnp.bfloat16)
                    + _block_bytes((1, n1cat), jnp.float32)
                    + _block_bytes((n1p, cp), jnp.bfloat16)
                    + _block_bytes((1, cp), jnp.float32)
                    + _block_bytes((tb, cp), jnp.float32))
    resident += _block_bytes((tb, n0cat), jnp.float32)
    vmem_limit = int(min(max(int(resident * 1.5) + (2 << 20), 16 << 20), 100 << 20))

    flops = 2 * b_pad * (k0p * n0cat + n0p * n1cat + n1p * cp)
    transcendentals = b_pad * 2 * (n0p + n1p)
    bytes_accessed = (x_p.size * 2 + w0.size * 2 + w1.size * 2 + wfc.size * 2
                      + b0.size * 4 + b1.size * 4 + bfc.size * 4 + b_pad * cp * 4)

    out = pl.pallas_call(
        _make_kernel(n0p, n1p),
        out_shape=jax.ShapeDtypeStruct((b_pad, cp), jnp.float32),
        grid_spec=pltpu.PrefetchScalarGridSpec(
            num_scalar_prefetch=0,
            grid=(nb, nk),
            in_specs=in_specs,
            out_specs=out_spec,
            scratch_shapes=[pltpu.VMEM((tb, n0cat), jnp.float32)],
        ),
        compiler_params=pltpu.CompilerParams(
            dimension_semantics=("parallel", "arbitrary"),
            vmem_limit_bytes=vmem_limit,
        ),
        cost_estimate=pl.CostEstimate(
            flops=flops,
            transcendentals=transcendentals,
            bytes_accessed=bytes_accessed,
        ),
    )(x_p, w0, b0, w1, b1, wfc, bfc)

    return out[:B, :c]


if __name__ == "__main__":
    VOCAB = 50
    HIDDEN = 32
    SENT_LEN = 8
    BATCH = 2

    key = jax.random.PRNGKey(0)
    k_params, k_tokens = jax.random.split(key)
    params = init_params(k_params, VOCAB, HIDDEN, SENT_LEN)
    tokens = jax.random.randint(k_tokens, (BATCH, SENT_LEN), 0, VOCAB, dtype=jnp.int32)

    logits = highway_text_forward(tokens, params)
    jax.block_until_ready(logits)
    assert logits.shape == (BATCH, HIDDEN), logits.shape
    assert bool(jnp.all(jnp.isfinite(logits)))
    print("KERNEL_OK")
</pallas_src>

<mosaic_0001>
module attributes {stable_mosaic.version = 11 : i64} {
  func.func @kernel(%arg0: i32, %arg1: i32, %arg2: memref<16x256xbf16, #tpu.memory_space<vmem>>, %arg3: memref<256x384xbf16, #tpu.memory_space<vmem>>, %arg4: memref<1x384xf32, #tpu.memory_space<vmem>>, %arg5: memref<128x384xbf16, #tpu.memory_space<vmem>>, %arg6: memref<1x384xf32, #tpu.memory_space<vmem>>, %arg7: memref<128x128xbf16, #tpu.memory_space<vmem>>, %arg8: memref<1x128xf32, #tpu.memory_space<vmem>>, %arg9: memref<16x128xf32, #tpu.memory_space<vmem>>, %arg10: memref<16x384xf32, #tpu.memory_space<vmem>>) attributes {dimension_semantics = [#tpu.dimension_semantics<parallel>, #tpu.dimension_semantics<arbitrary>], iteration_bounds = array<i64: 1, 1>, scalar_prefetch = 0 : i64, scratch_operands = 1 : i64, tpu.core_type = #tpu.core_type<tc>, window_params = [{transform_indices = @transform_0, window_bounds = array<i64: 16, 256>}, {transform_indices = @transform_1, window_bounds = array<i64: 256, 384>}, {pipeline_mode = #tpu.pipeline_mode<synchronous>, transform_indices = @transform_2, window_bounds = array<i64: 1, 384>}, {pipeline_mode = #tpu.pipeline_mode<synchronous>, transform_indices = @transform_3, window_bounds = array<i64: 128, 384>}, {pipeline_mode = #tpu.pipeline_mode<synchronous>, transform_indices = @transform_4, window_bounds = array<i64: 1, 384>}, {pipeline_mode = #tpu.pipeline_mode<synchronous>, transform_indices = @transform_5, window_bounds = array<i64: 128, 128>}, {pipeline_mode = #tpu.pipeline_mode<synchronous>, transform_indices = @transform_6, window_bounds = array<i64: 1, 128>}, {transform_indices = @transform_7, window_bounds = array<i64: 16, 128>}]} {
    %c0_i32 = arith.constant 0 : i32
    %0 = arith.cmpi eq, %arg1, %c0_i32 : i32
    %1 = arith.extui %0 : i1 to i32
    %c0_i32_0 = arith.constant 0 : i32
    %2 = arith.cmpi ne, %1, %c0_i32_0 : i32
    scf.if %2 {
      %cst_10 = arith.constant 0.000000e+00 : f32
      %12 = vector.broadcast %cst_10 : f32 to vector<16x384xf32>
      %c0_11 = arith.constant 0 : index
      %c0_12 = arith.constant 0 : index
      %13 = vector.load %arg10[%c0_11, %c0_12] : memref<16x384xf32, #tpu.memory_space<vmem>>, vector<16x384xf32>
      tpu.vector_store %arg10[%c0_11, %c0_12], %12 {strides = array<i32>} : memref<16x384xf32, #tpu.memory_space<vmem>>, vector<16x384xf32>,
    } else {
    }
    %c0 = arith.constant 0 : index
    %c0_1 = arith.constant 0 : index
    %3 = vector.load %arg10[%c0, %c0_1] : memref<16x384xf32, #tpu.memory_space<vmem>>, vector<16x384xf32>
    %c0_2 = arith.constant 0 : index
    %c0_3 = arith.constant 0 : index
    %4 = vector.load %arg2[%c0_2, %c0_3] : memref<16x256xbf16, #tpu.memory_space<vmem>>, vector<16x256xbf16>
    %c0_4 = arith.constant 0 : index
    %c0_5 = arith.constant 0 : index
    %5 = vector.load %arg3[%c0_4, %c0_5] : memref<256x384xbf16, #tpu.memory_space<vmem>>, vector<256x384xbf16>
    %cst = arith.constant dense<0.000000e+00> : vector<16x384xf32>
    %6 = tpu.matmul %4, %5, %cst {dimension_numbers = #tpu.dot_dimension_numbers<[1], [0], [0], [1], [0, 0, 1, 1], [], []>} : vector<16x256xbf16>, vector<256x384xbf16>, vector<16x384xf32> -> vector<16x384xf32>
    %7 = arith.addf %3, %6 : vector<16x384xf32>
    %c0_6 = arith.constant 0 : index
    %c0_7 = arith.constant 0 : index
    %8 = vector.load %arg10[%c0_6, %c0_7] : memref<16x384xf32, #tpu.memory_space<vmem>>, vector<16x384xf32>
    tpu.vector_store %arg10[%c0_6, %c0_7], %7 {strides = array<i32>} : memref<16x384xf32, #tpu.memory_space<vmem>>, vector<16x384xf32>,
    %c0_i32_8 = arith.constant 0 : i32
    %9 = arith.cmpi eq, %arg1, %c0_i32_8 : i32
    %10 = arith.extui %9 : i1 to i32
    %c0_i32_9 = arith.constant 0 : i32
    %11 = arith.cmpi ne, %10, %c0_i32_9 : i32
    scf.if %11 {
      %c0_10 = arith.constant 0 : index
      %c0_11 = arith.constant 0 : index
      %12 = vector.load %arg10[%c0_10, %c0_11] : memref<16x384xf32, #tpu.memory_space<vmem>>, vector<16x384xf32>
      %c0_12 = arith.constant 0 : index
      %c0_13 = arith.constant 0 : index
      %13 = vector.load %arg4[%c0_12, %c0_13] : memref<1x384xf32, #tpu.memory_space<vmem>>, vector<1x384xf32>
      %14 = vector.broadcast %13 : vector<1x384xf32> to vector<16x384xf32>
      %15 = arith.addf %12, %14 : vector<16x384xf32>
      %16 = vector.extract_strided_slice %15 {offsets = [0, 0], sizes = [16, 128], strides = [1, 1]} : vector<16x384xf32> to vector<16x128xf32>
      %17 = arith.negf %16 : vector<16x128xf32>
      %18 = math.exp %17 : vector<16x128xf32>
      %cst_14 = arith.constant 1.000000e+00 : f32
      %19 = vector.broadcast %cst_14 : f32 to vector<16x128xf32>
      %20 = arith.addf %19, %18 : vector<16x128xf32>
      %21 = arith.divf %19, %20 : vector<16x128xf32>
      %22 = vector.extract_strided_slice %15 {offsets = [0, 128], sizes = [16, 128], strides = [1, 1]} : vector<16x384xf32> to vector<16x128xf32>
      %23 = math.tanh %22 : vector<16x128xf32>
      %24 = vector.extract_strided_slice %15 {offsets = [0, 256], sizes = [16, 128], strides = [1, 1]} : vector<16x384xf32> to vector<16x128xf32>
      %25 = arith.subf %23, %24 : vector<16x128xf32>
      %26 = arith.mulf %21, %25 : vector<16x128xf32>
      %27 = arith.addf %24, %26 : vector<16x128xf32>
      %28 = arith.truncf %27 : vector<16x128xf32> to vector<16x128xbf16>
      %c0_15 = arith.constant 0 : index
      %c0_16 = arith.constant 0 : index
      %29 = vector.load %arg5[%c0_15, %c0_16] : memref<128x384xbf16, #tpu.memory_space<vmem>>, vector<128x384xbf16>
      %cst_17 = arith.constant dense<0.000000e+00> : vector<16x384xf32>
      %30 = tpu.matmul %28, %29, %cst_17 {dimension_numbers = #tpu.dot_dimension_numbers<[1], [0], [0], [1], [0, 0, 1, 1], [], []>} : vector<16x128xbf16>, vector<128x384xbf16>, vector<16x384xf32> -> vector<16x384xf32>
      %c0_18 = arith.constant 0 : index
      %c0_19 = arith.constant 0 : index
      %31 = vector.load %arg6[%c0_18, %c0_19] : memref<1x384xf32, #tpu.memory_space<vmem>>, vector<1x384xf32>
      %32 = vector.broadcast %31 : vector<1x384xf32> to vector<16x384xf32>
      %33 = arith.addf %30, %32 : vector<16x384xf32>
      %34 = vector.extract_strided_slice %33 {offsets = [0, 0], sizes = [16, 128], strides = [1, 1]} : vector<16x384xf32> to vector<16x128xf32>
      %35 = arith.negf %34 : vector<16x128xf32>
      %36 = math.exp %35 : vector<16x128xf32>
      %cst_20 = arith.constant 1.000000e+00 : f32
      %37 = vector.broadcast %cst_20 : f32 to vector<16x128xf32>
      %38 = arith.addf %37, %36 : vector<16x128xf32>
      %39 = arith.divf %37, %38 : vector<16x128xf32>
      %40 = vector.extract_strided_slice %33 {offsets = [0, 128], sizes = [16, 128], strides = [1, 1]} : vector<16x384xf32> to vector<16x128xf32>
      %41 = math.tanh %40 : vector<16x128xf32>
      %42 = vector.extract_strided_slice %33 {offsets = [0, 256], sizes = [16, 128], strides = [1, 1]} : vector<16x384xf32> to vector<16x128xf32>
      %43 = arith.subf %41, %42 : vector<16x128xf32>
      %44 = arith.mulf %39, %43 : vector<16x128xf32>
      %45 = arith.addf %42, %44 : vector<16x128xf32>
      %46 = arith.truncf %45 : vector<16x128xf32> to vector<16x128xbf16>
      %c0_21 = arith.constant 0 : index
      %c0_22 = arith.constant 0 : index
      %47 = vector.load %arg7[%c0_21, %c0_22] : memref<128x128xbf16, #tpu.memory_space<vmem>>, vector<128x128xbf16>
      %cst_23 = arith.constant dense<0.000000e+00> : vector<16x128xf32>
      %48 = tpu.matmul %46, %47, %cst_23 {dimension_numbers = #tpu.dot_dimension_numbers<[1], [0], [0], [1], [0, 0, 1, 1], [], []>} : vector<16x128xbf16>, vector<128x128xbf16>, vector<16x128xf32> -> vector<16x128xf32>
      %c0_24 = arith.constant 0 : index
      %c0_25 = arith.constant 0 : index
      %49 = vector.load %arg8[%c0_24, %c0_25] : memref<1x128xf32, #tpu.memory_space<vmem>>, vector<1x128xf32>
      %50 = vector.broadcast %49 : vector<1x128xf32> to vector<16x128xf32>
      %51 = arith.addf %48, %50 : vector<16x128xf32>
      %c0_26 = arith.constant 0 : index
      %c0_27 = arith.constant 0 : index
      %52 = vector.load %arg9[%c0_26, %c0_27] : memref<16x128xf32, #tpu.memory_space<vmem>>, vector<16x128xf32>
      tpu.vector_store %arg9[%c0_26, %c0_27], %51 {strides = array<i32>} : memref<16x128xf32, #tpu.memory_space<vmem>>, vector<16x128xf32>,
    } else {
    }
    return
  }
  func.func @transform_0(%arg0: i32, %arg1: i32) -> (i32, i32) {
    %c0_i32 = arith.constant 0 : i32
    return %arg0, %arg1 : i32, i32
  }
  func.func @transform_1(%arg0: i32, %arg1: i32) -> (i32, i32) {
    %c0_i32 = arith.constant 0 : i32
    %c0_i32_0 = arith.constant 0 : i32
    return %arg1, %c0_i32 : i32, i32
  }
  func.func @transform_2(%arg0: i32, %arg1: i32) -> (i32, i32) {
    %c0_i32 = arith.constant 0 : i32
    %c0_i32_0 = arith.constant 0 : i32
    %c0_i32_1 = arith.constant 0 : i32
    return %c0_i32, %c0_i32_0 : i32, i32
  }
  func.func @transform_3(%arg0: i32, %arg1: i32) -> (i32, i32) {
    %c0_i32 = arith.constant 0 : i32
    %c0_i32_0 = arith.constant 0 : i32
    %c0_i32_1 = arith.constant 0 : i32
    return %c0_i32, %c0_i32_0 : i32, i32
  }
  func.func @transform_4(%arg0: i32, %arg1: i32) -> (i32, i32) {
    %c0_i32 = arith.constant 0 : i32
    %c0_i32_0 = arith.constant 0 : i32
    %c0_i32_1 = arith.constant 0 : i32
    return %c0_i32, %c0_i32_0 : i32, i32
  }
  func.func @transform_5(%arg0: i32, %arg1: i32) -> (i32, i32) {
    %c0_i32 = arith.constant 0 : i32
    %c0_i32_0 = arith.constant 0 : i32
    %c0_i32_1 = arith.constant 0 : i32
    return %c0_i32, %c0_i32_0 : i32, i32
  }
  func.func @transform_6(%arg0: i32, %arg1: i32) -> (i32, i32) {
    %c0_i32 = arith.constant 0 : i32
    %c0_i32_0 = arith.constant 0 : i32
    %c0_i32_1 = arith.constant 0 : i32
    return %c0_i32, %c0_i32_0 : i32, i32
  }
  func.func @transform_7(%arg0: i32, %arg1: i32) -> (i32, i32) {
    %c0_i32 = arith.constant 0 : i32
    %c0_i32_0 = arith.constant 0 : i32
    return %arg0, %c0_i32 : i32, i32
  }
}

</mosaic_0001>

<llo_original>
// kernel: tpu_custom_call.1
$region0: #{tpu_custom_call.1}
  #allocation0 [shape = 'u32[]', space=smem, size = 0x4, offset = 0x4, fixed_abs, tag = 'smem constant byte address 0x4 - core index']
  #allocation1 [shape = 'u32[144,128]{1,0:T(1,128)}', space=vmem, size = 0x12000, scoped, tag = 'internal scratch']
  #allocation2 [shape = 'f32[16,384]{1,0:T(8,128)}', space=vmem, size = 0x6000, scoped, tag = 'scratch operand']
  %s0 = inlined_call_operand.hbm [shape: bf16[16,256], index: 0, kind: input, shape index: {}]
  %s1 = inlined_call_operand.hbm [shape: bf16[256,384], index: 1, kind: input, shape index: {}]
  %s2 = inlined_call_operand.vmem [shape: f32[1,384], index: 2, kind: input, shape index: {}]
  %s3 = inlined_call_operand.hbm [shape: bf16[128,384], index: 3, kind: input, shape index: {}]
  %s4 = inlined_call_operand.vmem [shape: f32[1,384], index: 4, kind: input, shape index: {}]
  %s5 = inlined_call_operand.hbm [shape: bf16[128,128], index: 5, kind: input, shape index: {}]
  %s6 = inlined_call_operand.vmem [shape: f32[1,128], index: 6, kind: input, shape index: {}]
  %s7 = inlined_call_operand.hbm [shape: f32[16,128], index: 7, kind: output, shape index: {}]
  %s8 = sld [smem:[#allocation0]]
  $region62: #{tpu_custom_call.1} parent=0
    _
  %s10 = ssub.s32 1, %s8
  %s11 = scalar_select 0, %s10, %s8
  $region1: #{tpu_custom_call.1} parent=0
    #allocation3 [shape = 'u8[8192]{0}', space=vmem, size = 0x2000, scoped, tag = 'input window, operand 0, single buffered']
    #allocation4 [shape = 's32[1]{0}', space=sflag, size = 0x4, scoped, tag = 'scoped memory for tpu_custom_call.1']
    #allocation5 [shape = 's32[1]{0}', space=sflag, size = 0x4, scoped, tag = 'scoped memory for tpu_custom_call.1']
    #allocation6 [shape = 'u8[196608]{0}', space=vmem, size = 0x30000, scoped, tag = 'input window, operand 1, single buffered']
    #allocation7 [shape = 's32[1]{0}', space=sflag, size = 0x4, scoped, tag = 'scoped memory for tpu_custom_call.1']
    #allocation8 [shape = 'u8[98304]{0}', space=vmem, size = 0x18000, scoped, tag = 'input window, operand 3, single buffered']
    #allocation9 [shape = 'u8[32768]{0}', space=vmem, size = 0x8000, scoped, tag = 'input window, operand 5, single buffered']
    #allocation10 [shape = 's32[1]{0}', space=sflag, size = 0x4, scoped, tag = 'scoped memory for tpu_custom_call.1']
    #allocation11 [shape = 'u8[8192]{0}', space=vmem, size = 0x2000, scoped, tag = 'output window, operand 0, single buffered']
    %12 = vsyncpa [#allocation4], 0
    %13 = vsyncpa [#allocation7], 0
    %14 = vsyncpa [#allocation10], 0
    %15 = vsyncpa [#allocation5], 0
    // Predicated region
    $region2: #{tpu_custom_call.1} parent=1 // pred_check
      _
    $region3: #{tpu_custom_call.1} parent=1 // pred_check_branch
      %17 = sbr.rel (0) target = $region5
    $region4: #{tpu_custom_call.1} parent=1 // pred_region
      %s19 = ssub.s32 256, 256
      %20 = vsyncadd [#allocation4], %s19
      %s21 = sshll.u32 [#allocation3], 4
      %s22 = int_to_ptr.vmem [resolvable:$true] %s21
      %27 = dma.hbm_to_vmem [thread:$0]  %s0, 256, %s22, [#allocation4], 128, 128, 8
    $region5: #{tpu_custom_call.1} parent=1 // pred_fallthru
      _
    // Predicated region
    $region6: #{tpu_custom_call.1} parent=1 // pred_check
      _
    $region7: #{tpu_custom_call.1} parent=1 // pred_check_branch
      %29 = sbr.rel (0) target = $region9
    $region8: #{tpu_custom_call.1} parent=1 // pred_region
      %s31 = ssub.s32 6144, 6144
      %32 = vsyncadd [#allocation7], %s31
      %s33 = sshll.u32 [#allocation6], 4
      %s34 = int_to_ptr.vmem [resolvable:$true] %s33
      %39 = dma.hbm_to_vmem [thread:$0]  %s1, 6144, %s34, [#allocation7], 192, 192, 12
    $region9: #{tpu_custom_call.1} parent=1 // pred_fallthru
      _
    // Predicated region
    $region10: #{tpu_custom_call.1} parent=1 // pred_check
      _
    $region11: #{tpu_custom_call.1} parent=1 // pred_check_branch
      %41 = sbr.rel (0) target = $region13
    $region12: #{tpu_custom_call.1} parent=1 // pred_region
      _
    $region13: #{tpu_custom_call.1} parent=1 // pred_fallthru
      _
    // Predicated region
    $region14: #{tpu_custom_call.1} parent=1 // pred_check
      _
    $region15: #{tpu_custom_call.1} parent=1 // pred_check_branch
      %43 = sbr.rel (0) target = $region17
    $region16: #{tpu_custom_call.1} parent=1 // pred_region
      %s45 = ssub.s32 3072, 3072
      %46 = vsyncadd [#allocation7], %s45
      %s47 = sshll.u32 [#allocation8], 4
      %s48 = int_to_ptr.vmem [resolvable:$true] %s47
      %53 = dma.hbm_to_vmem [thread:$0]  %s3, 3072, %s48, [#allocation7], 192, 192, 12
    $region17: #{tpu_custom_call.1} parent=1 // pred_fallthru
      _
    // Predicated region
    $region18: #{tpu_custom_call.1} parent=1 // pred_check
      _
    $region19: #{tpu_custom_call.1} parent=1 // pred_check_branch
      %55 = sbr.rel (0) target = $region21
    $region20: #{tpu_custom_call.1} parent=1 // pred_region
      _
    $region21: #{tpu_custom_call.1} parent=1 // pred_fallthru
      _
    // Predicated region
    $region22: #{tpu_custom_call.1} parent=1 // pred_check
      _
    $region23: #{tpu_custom_call.1} parent=1 // pred_check_branch
      %57 = sbr.rel (0) target = $region25
    $region24: #{tpu_custom_call.1} parent=1 // pred_region
      %s59 = ssub.s32 1024, 1024
      %60 = vsyncadd [#allocation10], %s59
      %s61 = sshll.u32 [#allocation9], 4
      %s62 = int_to_ptr.vmem [resolvable:$true] %s61
      %67 = dma.hbm_to_vmem [thread:$0]  %s5, 1024, %s62, [#allocation10], 64, 64, 4
    $region25: #{tpu_custom_call.1} parent=1 // pred_fallthru
      _
    // Predicated region
    $region26: #{tpu_custom_call.1} parent=1 // pred_check
      _
    $region27: #{tpu_custom_call.1} parent=1 // pred_check_branch
      %69 = sbr.rel (0) target = $region29
    $region28: #{tpu_custom_call.1} parent=1 // pred_region
      _
    $region29: #{tpu_custom_call.1} parent=1 // pred_fallthru
      _
    // Predicated region
    $region30: #{tpu_custom_call.1} parent=1 // pred_check
      _
    $region31: #{tpu_custom_call.1} parent=1 // pred_check_branch
      %71 = sbr.rel (0) target = $region33
    $region32: #{tpu_custom_call.1} parent=1 // pred_region
      %72 = dma.done [#allocation4], 256
    $region33: #{tpu_custom_call.1} parent=1 // pred_fallthru
      _
    // Predicated region
    $region34: #{tpu_custom_call.1} parent=1 // pred_check
      _
    $region35: #{tpu_custom_call.1} parent=1 // pred_check_branch
      %74 = sbr.rel (0) target = $region37
    $region36: #{tpu_custom_call.1} parent=1 // pred_region
      %75 = dma.done [#allocation7], 6144
    $region37: #{tpu_custom_call.1} parent=1 // pred_fallthru
      _
    // Predicated region
    $region38: #{tpu_custom_call.1} parent=1 // pred_check
      _
    $region39: #{tpu_custom_call.1} parent=1 // pred_check_branch
      %77 = sbr.rel (0) target = $region41
    $region40: #{tpu_custom_call.1} parent=1 // pred_region
      %78 = dma.done [#allocation7], 3072
    $region41: #{tpu_custom_call.1} parent=1 // pred_fallthru
      _
    // Predicated region
    $region42: #{tpu_custom_call.1} parent=1 // pred_check
      _
    $region43: #{tpu_custom_call.1} parent=1 // pred_check_branch
      %80 = sbr.rel (0) target = $region45
    $region44: #{tpu_custom_call.1} parent=1 // pred_region
      %81 = dma.done [#allocation10], 1024
    $region45: #{tpu_custom_call.1} parent=1 // pred_fallthru
      _
    %p83 = scmp.eq.s32.totalorder 0, 0
    // Predicated region
    $region46: #{tpu_custom_call.1} parent=1 // pred_check
      %p84 = pneg %p83
    $region47: #{tpu_custom_call.1} parent=1 // pred_check_branch
      %86 = sbr.rel (%p84) target = $region49
    $region48: #{tpu_custom_call.1} parent=1 // pred_region
      %87 = vst [vmem:[#allocation2] sm:$0xff] 0.0
      %88 = vst [vmem:[#allocation2 + $0x8] sm:$0xff] 0.0
      %89 = vst [vmem:[#allocation2 + $0x10] sm:$0xff] 0.0
      %90 = vst [vmem:[#allocation2 + $0x18] sm:$0xff] 0.0
      %91 = vst [vmem:[#allocation2 + $0x20] sm:$0xff] 0.0
      %92 = vst [vmem:[#allocation2 + $0x28] sm:$0xff] 0.0
    $region49: #{tpu_custom_call.1} parent=1 // pred_fallthru
      _
    %v93 = vld [vmem:[#allocation2] sm:$0xff]
    %v94 = vld [vmem:[#allocation2 + $0x8] sm:$0xff]
    %v95 = vld [vmem:[#allocation2 + $0x10] sm:$0xff]
    %v96 = vld [vmem:[#allocation2 + $0x18] sm:$0xff]
    %v97 = vld [vmem:[#allocation2 + $0x20] sm:$0xff]
    %v98 = vld [vmem:[#allocation2 + $0x28] sm:$0xff]
    %v99 = vld [vmem:[#allocation3] sm:$0xff]
    %v100 = vld [vmem:[#allocation3 + $0x8] sm:$0xff]
    %v101 = vld [vmem:[#allocation6] sm:$0xff]
    %v102 = vld [vmem:[#allocation6 + $0x8] sm:$0xf]
    %v103 = vld [vmem:[#allocation6 + $0xc] sm:$0xff]
    %v104 = vld [vmem:[#allocation6 + $0x14] sm:$0xf]
    %v105 = vld [vmem:[#allocation6 + $0x18] sm:$0xff]
    %v106 = vld [vmem:[#allocation6 + $0x20] sm:$0xf]
    %v107 = vld [vmem:[#allocation6 + $0x24] sm:$0xff]
    %v108 = vld [vmem:[#allocation6 + $0x2c] sm:$0xf]
    %v109 = vld [vmem:[#allocation6 + $0x30] sm:$0xff]
    %v110 = vld [vmem:[#allocation6 + $0x38] sm:$0xf]
    %v111 = vld [vmem:[#allocation6 + $0x3c] sm:$0xff]
    %v112 = vld [vmem:[#allocation6 + $0x44] sm:$0xf]
    %v113 = vld [vmem:[#allocation6 + $0x48] sm:$0xff]
    %v114 = vld [vmem:[#allocation6 + $0x50] sm:$0xf]
    %v115 = vld [vmem:[#allocation6 + $0x54] sm:$0xff]
    %v116 = vld [vmem:[#allocation6 + $0x5c] sm:$0xf]
    %v117 = vld [vmem:[#allocation6 + $0x60] sm:$0xff]
    %v118 = vld [vmem:[#allocation6 + $0x68] sm:$0xf]
    %v119 = vld [vmem:[#allocation6 + $0x6c] sm:$0xff]
    %v120 = vld [vmem:[#allocation6 + $0x74] sm:$0xf]
    %v121 = vld [vmem:[#allocation6 + $0x78] sm:$0xff]
    %v122 = vld [vmem:[#allocation6 + $0x80] sm:$0xf]
    %v123 = vld [vmem:[#allocation6 + $0x84] sm:$0xff]
    %v124 = vld [vmem:[#allocation6 + $0x8c] sm:$0xf]
    %v125 = vld [vmem:[#allocation6 + $0x90] sm:$0xff]
    %v126 = vld [vmem:[#allocation6 + $0x98] sm:$0xf]
    %v127 = vld [vmem:[#allocation6 + $0x9c] sm:$0xff]
    %v128 = vld [vmem:[#allocation6 + $0xa4] sm:$0xf]
    %v129 = vld [vmem:[#allocation6 + $0xa8] sm:$0xff]
    %v130 = vld [vmem:[#allocation6 + $0xb0] sm:$0xf]
    %v131 = vld [vmem:[#allocation6 + $0xb4] sm:$0xff]
    %v132 = vld [vmem:[#allocation6 + $0xbc] sm:$0xf]
    %v133 = vld [vmem:[#allocation6 + $0xc0] sm:$0xff]
    %v134 = vld [vmem:[#allocation6 + $0xc8] sm:$0xf]
    %v135 = vld [vmem:[#allocation6 + $0xcc] sm:$0xff]
    %v136 = vld [vmem:[#allocation6 + $0xd4] sm:$0xf]
    %v137 = vld [vmem:[#allocation6 + $0xd8] sm:$0xff]
    %v138 = vld [vmem:[#allocation6 + $0xe0] sm:$0xf]
    %v139 = vld [vmem:[#allocation6 + $0xe4] sm:$0xff]
    %v140 = vld [vmem:[#allocation6 + $0xec] sm:$0xf]
    %v141 = vld [vmem:[#allocation6 + $0xf0] sm:$0xff]
    %v142 = vld [vmem:[#allocation6 + $0xf8] sm:$0xf]
    %v143 = vld [vmem:[#allocation6 + $0xfc] sm:$0xff]
    %v144 = vld [vmem:[#allocation6 + $0x104] sm:$0xf]
    %v145 = vld [vmem:[#allocation6 + $0x108] sm:$0xff]
    %v146 = vld [vmem:[#allocation6 + $0x110] sm:$0xf]
    %v147 = vld [vmem:[#allocation6 + $0x114] sm:$0xff]
    %v148 = vld [vmem:[#allocation6 + $0x11c] sm:$0xf]
    %v149 = vld [vmem:[#allocation6 + $0x120] sm:$0xff]
    %v150 = vld [vmem:[#allocation6 + $0x128] sm:$0xf]
    %v151 = vld [vmem:[#allocation6 + $0x12c] sm:$0xff]
    %v152 = vld [vmem:[#allocation6 + $0x134] sm:$0xf]
    %v153 = vld [vmem:[#allocation6 + $0x138] sm:$0xff]
    %v154 = vld [vmem:[#allocation6 + $0x140] sm:$0xf]
    %v155 = vld [vmem:[#allocation6 + $0x144] sm:$0xff]
    %v156 = vld [vmem:[#allocation6 + $0x14c] sm:$0xf]
    %v157 = vld [vmem:[#allocation6 + $0x150] sm:$0xff]
    %v158 = vld [vmem:[#allocation6 + $0x158] sm:$0xf]
    %v159 = vld [vmem:[#allocation6 + $0x15c] sm:$0xff]
    %v160 = vld [vmem:[#allocation6 + $0x164] sm:$0xf]
    %v161 = vld [vmem:[#allocation6 + $0x168] sm:$0xff]
    %v162 = vld [vmem:[#allocation6 + $0x170] sm:$0xf]
    %v163 = vld [vmem:[#allocation6 + $0x174] sm:$0xff]
    %v164 = vld [vmem:[#allocation6 + $0x17c] sm:$0xf]
    %v167 = vunpack.c.l.b16 %v99
    %v168 = vunpack.c.h.b16 %v99
    %v169 = vunpack.c.l.b16 %v100
    %v170 = vunpack.c.h.b16 %v100
    %v171 = vpack.c.b16 %v169, %v167
    %v172 = vpack.c.b16 %v170, %v168
    %v239 = vunpack.c.l.b16 %v101
    %v240 = vunpack.c.h.b16 %v101
    %v241 = vunpack.c.l.b16 %v102
    %v242 = vunpack.c.l.b16 %v103
    %v243 = vunpack.c.h.b16 %v103
    %v244 = vunpack.c.l.b16 %v104
    %v245 = vunpack.c.l.b16 %v105
    %v246 = vunpack.c.h.b16 %v105
    %v247 = vunpack.c.l.b16 %v106
    %v248 = vunpack.c.l.b16 %v107
    %v249 = vunpack.c.h.b16 %v107
    %v250 = vunpack.c.l.b16 %v108
    %v251 = vunpack.c.l.b16 %v109
    %v252 = vunpack.c.h.b16 %v109
    %v253 = vunpack.c.l.b16 %v110
    %v254 = vunpack.c.l.b16 %v111
    %v255 = vunpack.c.h.b16 %v111
    %v256 = vunpack.c.l.b16 %v112
    %v257 = vunpack.c.l.b16 %v113
    %v258 = vunpack.c.h.b16 %v113
    %v259 = vunpack.c.l.b16 %v114
    %v260 = vunpack.c.l.b16 %v115
    %v261 = vunpack.c.h.b16 %v115
    %v262 = vunpack.c.l.b16 %v116
    %v263 = vunpack.c.l.b16 %v117
    %v264 = vunpack.c.h.b16 %v117
    %v265 = vunpack.c.l.b16 %v118
    %v266 = vunpack.c.l.b16 %v119
    %v267 = vunpack.c.h.b16 %v119
    %v268 = vunpack.c.l.b16 %v120
    %v269 = vunpack.c.l.b16 %v121
    %v270 = vunpack.c.h.b16 %v121
    %v271 = vunpack.c.l.b16 %v122
    %v272 = vunpack.c.l.b16 %v123
    %v273 = vunpack.c.h.b16 %v123
    %v274 = vunpack.c.l.b16 %v124
    %v275 = vunpack.c.l.b16 %v125
    %v276 = vunpack.c.h.b16 %v125
    %v277 = vunpack.c.l.b16 %v126
    %v278 = vunpack.c.l.b16 %v127
    %v279 = vunpack.c.h.b16 %v127
    %v280 = vunpack.c.l.b16 %v128
    %v281 = vunpack.c.l.b16 %v129
    %v282 = vunpack.c.h.b16 %v129
    %v283 = vunpack.c.l.b16 %v130
    %v284 = vunpack.c.l.b16 %v131
    %v285 = vunpack.c.h.b16 %v131
    %v286 = vunpack.c.l.b16 %v132
    %v287 = vunpack.c.l.b16 %v133
    %v288 = vunpack.c.h.b16 %v133
    %v289 = vunpack.c.l.b16 %v134
    %v290 = vunpack.c.l.b16 %v135
    %v291 = vunpack.c.h.b16 %v135
    %v292 = vunpack.c.l.b16 %v136
    %v293 = vunpack.c.l.b16 %v137
    %v294 = vunpack.c.h.b16 %v137
    %v295 = vunpack.c.l.b16 %v138
    %v296 = vunpack.c.l.b16 %v139
    %v297 = vunpack.c.h.b16 %v139
    %v298 = vunpack.c.l.b16 %v140
    %v299 = vunpack.c.l.b16 %v141
    %v300 = vunpack.c.h.b16 %v141
    %v301 = vunpack.c.l.b16 %v142
    %v302 = vunpack.c.l.b16 %v143
    %v303 = vunpack.c.h.b16 %v143
    %v304 = vunpack.c.l.b16 %v144
    %v305 = vunpack.c.l.b16 %v145
    %v306 = vunpack.c.h.b16 %v145
    %v307 = vunpack.c.l.b16 %v146
    %v308 = vunpack.c.l.b16 %v147
    %v309 = vunpack.c.h.b16 %v147
    %v310 = vunpack.c.l.b16 %v148
    %v311 = vunpack.c.l.b16 %v149
    %v312 = vunpack.c.h.b16 %v149
    %v313 = vunpack.c.l.b16 %v150
    %v314 = vunpack.c.l.b16 %v151
    %v315 = vunpack.c.h.b16 %v151
    %v316 = vunpack.c.l.b16 %v152
    %v317 = vunpack.c.l.b16 %v153
    %v318 = vunpack.c.h.b16 %v153
    %v319 = vunpack.c.l.b16 %v154
    %v320 = vunpack.c.l.b16 %v155
    %v321 = vunpack.c.h.b16 %v155
    %v322 = vunpack.c.l.b16 %v156
    %v323 = vunpack.c.l.b16 %v157
    %v324 = vunpack.c.h.b16 %v157
    %v325 = vunpack.c.l.b16 %v158
    %v326 = vunpack.c.l.b16 %v159
    %v327 = vunpack.c.h.b16 %v159
    %v328 = vunpack.c.l.b16 %v160
    %v329 = vunpack.c.l.b16 %v161
    %v330 = vunpack.c.h.b16 %v161
    %v331 = vunpack.c.l.b16 %v162
    %v332 = vunpack.c.l.b16 %v163
    %v333 = vunpack.c.h.b16 %v163
    %v334 = vunpack.c.l.b16 %v164
    %v335 = vpack.c.b16 %v242, %v239
    %v336 = vpack.c.b16 %v243, %v240
    %v337 = vpack.c.b16 %v244, %v241
    %v338 = vpack.c.b16 %v248, %v245
    %v339 = vpack.c.b16 %v249, %v246
    %v340 = vpack.c.b16 %v250, %v247
    %v341 = vpack.c.b16 %v254, %v251
    %v342 = vpack.c.b16 %v255, %v252
    %v343 = vpack.c.b16 %v256, %v253
    %v344 = vpack.c.b16 %v260, %v257
    %v345 = vpack.c.b16 %v261, %v258
    %v346 = vpack.c.b16 %v262, %v259
    %v347 = vpack.c.b16 %v266, %v263
    %v348 = vpack.c.b16 %v267, %v264
    %v349 = vpack.c.b16 %v268, %v265
    %v350 = vpack.c.b16 %v272, %v269
    %v351 = vpack.c.b16 %v273, %v270
    %v352 = vpack.c.b16 %v274, %v271
    %v353 = vpack.c.b16 %v278, %v275
    %v354 = vpack.c.b16 %v279, %v276
    %v355 = vpack.c.b16 %v280, %v277
    %v356 = vpack.c.b16 %v284, %v281
    %v357 = vpack.c.b16 %v285, %v282
    %v358 = vpack.c.b16 %v286, %v283
    %v359 = vpack.c.b16 %v290, %v287
    %v360 = vpack.c.b16 %v291, %v288
    %v361 = vpack.c.b16 %v292, %v289
    %v362 = vpack.c.b16 %v296, %v293
    %v363 = vpack.c.b16 %v297, %v294
    %v364 = vpack.c.b16 %v298, %v295
    %v365 = vpack.c.b16 %v302, %v299
    %v366 = vpack.c.b16 %v303, %v300
    %v367 = vpack.c.b16 %v304, %v301
    %v368 = vpack.c.b16 %v308, %v305
    %v369 = vpack.c.b16 %v309, %v306
    %v370 = vpack.c.b16 %v310, %v307
    %v371 = vpack.c.b16 %v314, %v311
    %v372 = vpack.c.b16 %v315, %v312
    %v373 = vpack.c.b16 %v316, %v313
    %v374 = vpack.c.b16 %v320, %v317
    %v375 = vpack.c.b16 %v321, %v318
    %v376 = vpack.c.b16 %v322, %v319
    %v377 = vpack.c.b16 %v326, %v323
    %v378 = vpack.c.b16 %v327, %v324
    %v379 = vpack.c.b16 %v328, %v325
    %v380 = vpack.c.b16 %v332, %v329
    %v381 = vpack.c.b16 %v333, %v330
    %v382 = vpack.c.b16 %v334, %v331
    %431 = vmatprep.subr.bf16.mxu0 %v336
    %432 = vmatpush1.bf16.msra.mxu0 %v335
    %433 = vmatprep.subr.bf16.mxu0 %v339
    %434 = vmatpush1.bf16.msra.mxu0 %v338
    %435 = vmatprep.subr.bf16.mxu0 %v342
    %436 = vmatpush1.bf16.msra.mxu0 %v341
    %437 = vmatprep.subr.bf16.mxu0 %v345
    %438 = vmatpush1.bf16.msra.mxu0 %v344
    %439 = vmatprep.subr.bf16.mxu0 %v348
    %440 = vmatpush1.bf16.msra.mxu0 %v347
    %441 = vmatprep.subr.bf16.mxu0 %v351
    %442 = vmatpush1.bf16.msra.mxu0 %v350
    %443 = vmatprep.subr.bf16.mxu0 %v354
    %444 = vmatpush1.bf16.msra.mxu0 %v353
    %445 = vmatprep.subr.bf16.mxu0 %v357
    %446 = vmatpush1.bf16.msra.mxu0 %v356
    %447 = vmatprep.subr.bf16.mxu0 %v360
    %448 = vmatpush1.bf16.msra.mxu0 %v359
    %449 = vmatprep.subr.bf16.mxu0 %v363
    %450 = vmatpush1.bf16.msra.mxu0 %v362
    %451 = vmatprep.subr.bf16.mxu0 %v366
    %452 = vmatpush1.bf16.msra.mxu0 %v365
    %453 = vmatprep.subr.bf16.mxu0 %v369
    %454 = vmatpush1.bf16.msra.mxu0 %v368
    %455 = vmatprep.subr.bf16.mxu0 %v372
    %456 = vmatpush1.bf16.msra.mxu0 %v371
    %457 = vmatprep.subr.bf16.mxu0 %v375
    %458 = vmatpush1.bf16.msra.mxu0 %v374
    %459 = vmatprep.subr.bf16.mxu0 %v378
    %460 = vmatpush1.bf16.msra.mxu0 %v377
    %461 = vmatprep.subr.bf16.mxu0 %v381
    %462 = vmatpush1.bf16.msra.mxu0 %v380
    %463 = vmatprep.mubr.bf16.mxu0 %v172
    %464 = vmatmul.mubr.bf16.gmra.mrb[0].mxu0 %v171
    %v465 = vpop.f32.mrb[0].mxu0
    %v466 = vadd.f32 0.0, %v465
    %v467 = vpop.f32.mrb[0].mxu0
    %v468 = vadd.f32 0.0, %v467
    %v469 = vpop.f32.mrb[0].mxu0
    %v470 = vadd.f32 0.0, %v469
    %v471 = vpop.f32.mrb[0].mxu0
    %v472 = vadd.f32 0.0, %v471
    %473 = vdwg.mxu0
    %474 = vmatprep.subr.bf16.mxu0 0
    %475 = vmatpush1.bf16.msra.mxu0 %v337
    %476 = vmatprep.subr.bf16.mxu0 0
    %477 = vmatpush1.bf16.msra.mxu0 %v340
    %478 = vmatprep.subr.bf16.mxu0 0
    %479 = vmatpush1.bf16.msra.mxu0 %v343
    %480 = vmatprep.subr.bf16.mxu0 0
    %481 = vmatpush1.bf16.msra.mxu0 %v346
    %482 = vmatprep.subr.bf16.mxu0 0
    %483 = vmatpush1.bf16.msra.mxu0 %v349
    %484 = vmatprep.subr.bf16.mxu0 0
    %485 = vmatpush1.bf16.msra.mxu0 %v352
    %486 = vmatprep.subr.bf16.mxu0 0
    %487 = vmatpush1.bf16.msra.mxu0 %v355
    %488 = vmatprep.subr.bf16.mxu0 0
    %489 = vmatpush1.bf16.msra.mxu0 %v358
    %490 = vmatprep.subr.bf16.mxu0 0
    %491 = vmatpush1.bf16.msra.mxu0 %v361
    %492 = vmatprep.subr.bf16.mxu0 0
    %493 = vmatpush1.bf16.msra.mxu0 %v364
    %494 = vmatprep.subr.bf16.mxu0 0
    %495 = vmatpush1.bf16.msra.mxu0 %v367
    %496 = vmatprep.subr.bf16.mxu0 0
    %497 = vmatpush1.bf16.msra.mxu0 %v370
    %498 = vmatprep.subr.bf16.mxu0 0
    %499 = vmatpush1.bf16.msra.mxu0 %v373
    %500 = vmatprep.subr.bf16.mxu0 0
    %501 = vmatpush1.bf16.msra.mxu0 %v376
    %502 = vmatprep.subr.bf16.mxu0 0
    %503 = vmatpush1.bf16.msra.mxu0 %v379
    %504 = vmatprep.subr.bf16.mxu0 0
    %505 = vmatpush1.bf16.msra.mxu0 %v382
    %506 = vmatprep.mubr.bf16.mxu0 %v172
    %507 = vmatmul.mubr.bf16.gmra.mrb[0].mxu0 %v171
    %v508 = vpop.f32.mrb[0].mxu0
    %v509 = vadd.f32 0.0, %v508
    %v510 = vpop.f32.mrb[0].mxu0
    %v511 = vpop.f32.mrb[0].mxu0
    %v512 = vadd.f32 0.0, %v511
    %v513 = vpop.f32.mrb[0].mxu0
    %514 = vdwg.mxu0
    %v515 = vadd.f32 %v93, %v466
    %v516 = vadd.f32 %v94, %v468
    %v517 = vadd.f32 %v95, %v509
    %v518 = vadd.f32 %v96, %v470
    %v519 = vadd.f32 %v97, %v472
    %v520 = vadd.f32 %v98, %v512
    %521 = vst [vmem:[#allocation2] sm:$0xff] %v515
    %522 = vst [vmem:[#allocation2 + $0x8] sm:$0xff] %v516
    %523 = vst [vmem:[#allocation2 + $0x10] sm:$0xff] %v517
    %524 = vst [vmem:[#allocation2 + $0x18] sm:$0xff] %v518
    %525 = vst [vmem:[#allocation2 + $0x20] sm:$0xff] %v519
    %526 = vst [vmem:[#allocation2 + $0x28] sm:$0xff] %v520
    // Predicated region
    $region50: #{tpu_custom_call.1} parent=1 // pred_check
      %p527 = pneg %p83
    $region51: #{tpu_custom_call.1} parent=1 // pred_check_branch
      %529 = sbr.rel (%p527) target = $region53
    $region52: #{tpu_custom_call.1} parent=1 // pred_region
      %v530 = vld [vmem:[#allocation2] sm:$0xff]
      %v531 = vld [vmem:[#allocation2 + $0x8] sm:$0xff]
      %v532 = vld [vmem:[#allocation2 + $0x10] sm:$0xff]
      %v533 = vld [vmem:[#allocation2 + $0x18] sm:$0xff]
      %v534 = vld [vmem:[#allocation2 + $0x20] sm:$0xff]
      %v535 = vld [vmem:[#allocation2 + $0x28] sm:$0xff]
      %v536 = vld [vmem:[%s2] sm:$0x7]
      %v538 = vlaneseq
      %v539 = vshrl.u32 %v538, 7
      %v540 = vsub.s32 0, %v539
      %v541 = vrot.slane %v536, %v540
      %v542 = vlaneseq
      %v543 = vshrl.u32 %v542, 7
      %v544 = vsub.s32 1, %v543
      %v545 = vrot.slane %v536, %v544
      %v546 = vlaneseq
      %v547 = vshrl.u32 %v546, 7
      %v548 = vsub.s32 2, %v547
      %v549 = vrot.slane %v536, %v548
      %v553 = vadd.f32 %v530, %v541
      %v554 = vadd.f32 %v531, %v545
      %v555 = vadd.f32 %v532, %v549
      %v556 = vadd.f32 %v533, %v541
      %v557 = vadd.f32 %v534, %v545
      %v558 = vadd.f32 %v535, %v549
      %v559 = vxor.u32 %v553, 2147483648
      %v560 = vxor.u32 %v556, 2147483648
      %v561 = vmul.f32 %v559, 1.442695
      %v562 = vpow.pop %v561
      %v563 = vmul.f32 %v560, 1.442695
      %v564 = vpow.pop %v563
      %v565 = vadd.f32 %v562, 1.0
      %v566 = vadd.f32 %v564, 1.0
      %v567 = vrcp.pop %v565
      %v568 = vmul.f32 1.0, %v567
      %v569 = vrcp.pop %v566
      %v570 = vmul.f32 1.0, %v569
      %v571 = vtanh.pop %v554
      %v572 = vtanh.pop %v557
      %v573 = vsub.f32 %v571, %v555
      %v574 = vsub.f32 %v572, %v558
      %v575 = vmul.f32 %v568, %v573
      %v576 = vmul.f32 %v570, %v574
      %v577 = vadd.f32 %v555, %v575
      %v578 = vadd.f32 %v558, %v576
      %v579 = vpack.c.bf16 %v578, %v577
      %v580 = vld [vmem:[#allocation8] sm:$0xff]
      %v581 = vld [vmem:[#allocation8 + $0x8] sm:$0xf]
      %v582 = vld [vmem:[#allocation8 + $0xc] sm:$0xff]
      %v583 = vld [vmem:[#allocation8 + $0x14] sm:$0xf]
      %v584 = vld [vmem:[#allocation8 + $0x18] sm:$0xff]
      %v585 = vld [vmem:[#allocation8 + $0x20] sm:$0xf]
      %v586 = vld [vmem:[#allocation8 + $0x24] sm:$0xff]
      %v587 = vld [vmem:[#allocation8 + $0x2c] sm:$0xf]
      %v588 = vld [vmem:[#allocation8 + $0x30] sm:$0xff]
      %v589 = vld [vmem:[#allocation8 + $0x38] sm:$0xf]
      %v590 = vld [vmem:[#allocation8 + $0x3c] sm:$0xff]
      %v591 = vld [vmem:[#allocation8 + $0x44] sm:$0xf]
      %v592 = vld [vmem:[#allocation8 + $0x48] sm:$0xff]
      %v593 = vld [vmem:[#allocation8 + $0x50] sm:$0xf]
      %v594 = vld [vmem:[#allocation8 + $0x54] sm:$0xff]
      %v595 = vld [vmem:[#allocation8 + $0x5c] sm:$0xf]
      %v596 = vld [vmem:[#allocation8 + $0x60] sm:$0xff]
      %v597 = vld [vmem:[#allocation8 + $0x68] sm:$0xf]
      %v598 = vld [vmem:[#allocation8 + $0x6c] sm:$0xff]
      %v599 = vld [vmem:[#allocation8 + $0x74] sm:$0xf]
      %v600 = vld [vmem:[#allocation8 + $0x78] sm:$0xff]
      %v601 = vld [vmem:[#allocation8 + $0x80] sm:$0xf]
      %v602 = vld [vmem:[#allocation8 + $0x84] sm:$0xff]
      %v603 = vld [vmem:[#allocation8 + $0x8c] sm:$0xf]
      %v604 = vld [vmem:[#allocation8 + $0x90] sm:$0xff]
      %v605 = vld [vmem:[#allocation8 + $0x98] sm:$0xf]
      %v606 = vld [vmem:[#allocation8 + $0x9c] sm:$0xff]
      %v607 = vld [vmem:[#allocation8 + $0xa4] sm:$0xf]
      %v608 = vld [vmem:[#allocation8 + $0xa8] sm:$0xff]
      %v609 = vld [vmem:[#allocation8 + $0xb0] sm:$0xf]
      %v610 = vld [vmem:[#allocation8 + $0xb4] sm:$0xff]
      %v611 = vld [vmem:[#allocation8 + $0xbc] sm:$0xf]
      %v612 = vld [vmem:[%s4] sm:$0x7]
      %v614 = vlaneseq
      %v615 = vshrl.u32 %v614, 7
      %v616 = vsub.s32 0, %v615
      %v617 = vrot.slane %v612, %v616
      %v618 = vlaneseq
      %v619 = vshrl.u32 %v618, 7
      %v620 = vsub.s32 1, %v619
      %v621 = vrot.slane %v612, %v620
      %v622 = vlaneseq
      %v623 = vshrl.u32 %v622, 7
      %v624 = vsub.s32 2, %v623
      %v625 = vrot.slane %v612, %v624
      %v661 = vunpack.c.l.b16 %v580
      %v662 = vunpack.c.h.b16 %v580
      %v663 = vunpack.c.l.b16 %v581
      %v664 = vunpack.c.l.b16 %v582
      %v665 = vunpack.c.h.b16 %v582
      %v666 = vunpack.c.l.b16 %v583
      %v667 = vunpack.c.l.b16 %v584
      %v668 = vunpack.c.h.b16 %v584
      %v669 = vunpack.c.l.b16 %v585
      %v670 = vunpack.c.l.b16 %v586
      %v671 = vunpack.c.h.b16 %v586
      %v672 = vunpack.c.l.b16 %v587
      %v673 = vunpack.c.l.b16 %v588
      %v674 = vunpack.c.h.b16 %v588
      %v675 = vunpack.c.l.b16 %v589
      %v676 = vunpack.c.l.b16 %v590
      %v677 = vunpack.c.h.b16 %v590
      %v678 = vunpack.c.l.b16 %v591
      %v679 = vunpack.c.l.b16 %v592
      %v680 = vunpack.c.h.b16 %v592
      %v681 = vunpack.c.l.b16 %v593
      %v682 = vunpack.c.l.b16 %v594
      %v683 = vunpack.c.h.b16 %v594
      %v684 = vunpack.c.l.b16 %v595
      %v685 = vunpack.c.l.b16 %v596
      %v686 = vunpack.c.h.b16 %v596
      %v687 = vunpack.c.l.b16 %v597
      %v688 = vunpack.c.l.b16 %v598
      %v689 = vunpack.c.h.b16 %v598
      %v690 = vunpack.c.l.b16 %v599
      %v691 = vunpack.c.l.b16 %v600
      %v692 = vunpack.c.h.b16 %v600
      %v693 = vunpack.c.l.b16 %v601
      %v694 = vunpack.c.l.b16 %v602
      %v695 = vunpack.c.h.b16 %v602
      %v696 = vunpack.c.l.b16 %v603
      %v697 = vunpack.c.l.b16 %v604
      %v698 = vunpack.c.h.b16 %v604
      %v699 = vunpack.c.l.b16 %v605
      %v700 = vunpack.c.l.b16 %v606
      %v701 = vunpack.c.h.b16 %v606
      %v702 = vunpack.c.l.b16 %v607
      %v703 = vunpack.c.l.b16 %v608
      %v704 = vunpack.c.h.b16 %v608
      %v705 = vunpack.c.l.b16 %v609
      %v706 = vunpack.c.l.b16 %v610
      %v707 = vunpack.c.h.b16 %v610
      %v708 = vunpack.c.l.b16 %v611
      %v709 = vpack.c.b16 %v664, %v661
      %v710 = vpack.c.b16 %v665, %v662
      %v711 = vpack.c.b16 %v666, %v663
      %v712 = vpack.c.b16 %v670, %v667
      %v713 = vpack.c.b16 %v671, %v668
      %v714 = vpack.c.b16 %v672, %v669
      %v715 = vpack.c.b16 %v676, %v673
      %v716 = vpack.c.b16 %v677, %v674
      %v717 = vpack.c.b16 %v678, %v675
      %v718 = vpack.c.b16 %v682, %v679
      %v719 = vpack.c.b16 %v683, %v680
      %v720 = vpack.c.b16 %v684, %v681
      %v721 = vpack.c.b16 %v688, %v685
      %v722 = vpack.c.b16 %v689, %v686
      %v723 = vpack.c.b16 %v690, %v687
      %v724 = vpack.c.b16 %v694, %v691
      %v725 = vpack.c.b16 %v695, %v692
      %v726 = vpack.c.b16 %v696, %v693
      %v727 = vpack.c.b16 %v700, %v697
      %v728 = vpack.c.b16 %v701, %v698
      %v729 = vpack.c.b16 %v702, %v699
      %v730 = vpack.c.b16 %v706, %v703
      %v731 = vpack.c.b16 %v707, %v704
      %v732 = vpack.c.b16 %v708, %v705
      %757 = vmatprep.subr.bf16.mxu0 %v710
      %758 = vmatpush1.bf16.msra.mxu0 %v709
      %759 = vmatprep.subr.bf16.mxu0 %v713
      %760 = vmatpush1.bf16.msra.mxu0 %v712
      %761 = vmatprep.subr.bf16.mxu0 %v716
      %762 = vmatpush1.bf16.msra.mxu0 %v715
      %763 = vmatprep.subr.bf16.mxu0 %v719
      %764 = vmatpush1.bf16.msra.mxu0 %v718
      %765 = vmatprep.subr.bf16.mxu0 %v722
      %766 = vmatpush1.bf16.msra.mxu0 %v721
      %767 = vmatprep.subr.bf16.mxu0 %v725
      %768 = vmatpush1.bf16.msra.mxu0 %v724
      %769 = vmatprep.subr.bf16.mxu0 %v728
      %770 = vmatpush1.bf16.msra.mxu0 %v727
      %771 = vmatprep.subr.bf16.mxu0 %v731
      %772 = vmatpush1.bf16.msra.mxu0 %v730
      %773 = vmatprep.subr.bf16.mxu0 0
      %774 = vmatpush1.bf16.msra.mxu0 0
      %775 = vmatprep.subr.bf16.mxu0 0
      %776 = vmatpush1.bf16.msra.mxu0 0
      %777 = vmatprep.subr.bf16.mxu0 0
      %778 = vmatpush1.bf16.msra.mxu0 0
      %779 = vmatprep.subr.bf16.mxu0 0
      %780 = vmatpush1.bf16.msra.mxu0 0
      %781 = vmatprep.subr.bf16.mxu0 0
      %782 = vmatpush1.bf16.msra.mxu0 0
      %783 = vmatprep.subr.bf16.mxu0 0
      %784 = vmatpush1.bf16.msra.mxu0 0
      %785 = vmatprep.subr.bf16.mxu0 0
      %786 = vmatpush1.bf16.msra.mxu0 0
      %787 = vmatprep.subr.bf16.mxu0 0
      %788 = vmatpush1.bf16.msra.mxu0 0
      %789 = vmatprep.mubr.bf16.mxu0 0
      %790 = vmatmul.mubr.bf16.gmra.mrb[0].mxu0 %v579
      %v791 = vpop.f32.mrb[0].mxu0
      %v792 = vadd.f32 %v617, %v791
      %v793 = vpop.f32.mrb[0].mxu0
      %v794 = vadd.f32 %v621, %v793
      %v795 = vpop.f32.mrb[0].mxu0
      %v796 = vadd.f32 %v617, %v795
      %v797 = vpop.f32.mrb[0].mxu0
      %v798 = vadd.f32 %v621, %v797
      %799 = vdwg.mxu0
      %800 = vmatprep.subr.bf16.mxu0 0
      %801 = vmatpush1.bf16.msra.mxu0 %v711
      %802 = vmatprep.subr.bf16.mxu0 0
      %803 = vmatpush1.bf16.msra.mxu0 %v714
      %804 = vmatprep.subr.bf16.mxu0 0
      %805 = vmatpush1.bf16.msra.mxu0 %v717
      %806 = vmatprep.subr.bf16.mxu0 0
      %807 = vmatpush1.bf16.msra.mxu0 %v720
      %808 = vmatprep.subr.bf16.mxu0 0
      %809 = vmatpush1.bf16.msra.mxu0 %v723
      %810 = vmatprep.subr.bf16.mxu0 0
      %811 = vmatpush1.bf16.msra.mxu0 %v726
      %812 = vmatprep.subr.bf16.mxu0 0
      %813 = vmatpush1.bf16.msra.mxu0 %v729
      %814 = vmatprep.subr.bf16.mxu0 0
      %815 = vmatpush1.bf16.msra.mxu0 %v732
      %816 = vmatprep.subr.bf16.mxu0 0
      %817 = vmatpush1.bf16.msra.mxu0 0
      %818 = vmatprep.subr.bf16.mxu0 0
      %819 = vmatpush1.bf16.msra.mxu0 0
      %820 = vmatprep.subr.bf16.mxu0 0
      %821 = vmatpush1.bf16.msra.mxu0 0
      %822 = vmatprep.subr.bf16.mxu0 0
      %823 = vmatpush1.bf16.msra.mxu0 0
      %824 = vmatprep.subr.bf16.mxu0 0
      %825 = vmatpush1.bf16.msra.mxu0 0
      %826 = vmatprep.subr.bf16.mxu0 0
      %827 = vmatpush1.bf16.msra.mxu0 0
      %828 = vmatprep.subr.bf16.mxu0 0
      %829 = vmatpush1.bf16.msra.mxu0 0
      %830 = vmatprep.subr.bf16.mxu0 0
      %831 = vmatpush1.bf16.msra.mxu0 0
      %832 = vmatprep.mubr.bf16.mxu0 0
      %833 = vmatmul.mubr.bf16.gmra.mrb[0].mxu0 %v579
      %v834 = vpop.f32.mrb[0].mxu0
      %v835 = vadd.f32 %v625, %v834
      %v836 = vpop.f32.mrb[0].mxu0
      %v837 = vpop.f32.mrb[0].mxu0
      %v838 = vadd.f32 %v625, %v837
      %v839 = vpop.f32.mrb[0].mxu0
      %840 = vdwg.mxu0
      %v841 = vxor.u32 %v792, 2147483648
      %v842 = vxor.u32 %v796, 2147483648
      %v843 = vmul.f32 %v841, 1.442695
      %v844 = vpow.pop %v843
      %v845 = vmul.f32 %v842, 1.442695
      %v846 = vpow.pop %v845
      %v847 = vadd.f32 %v844, 1.0
      %v848 = vadd.f32 %v846, 1.0
      %v849 = vrcp.pop %v847
      %v850 = vmul.f32 1.0, %v849
      %v851 = vrcp.pop %v848
      %v852 = vmul.f32 1.0, %v851
      %v853 = vtanh.pop %v794
      %v854 = vtanh.pop %v798
      %v855 = vsub.f32 %v853, %v835
      %v856 = vsub.f32 %v854, %v838
      %v857 = vmul.f32 %v850, %v855
      %v858 = vmul.f32 %v852, %v856
      %v859 = vadd.f32 %v835, %v857
      %v860 = vadd.f32 %v838, %v858
      %v861 = vpack.c.bf16 %v860, %v859
      %v862 = vld [vmem:[#allocation9] sm:$0xf]
      %v863 = vld [vmem:[#allocation9 + $0x4] sm:$0xf]
      %v864 = vld [vmem:[#allocation9 + $0x8] sm:$0xf]
      %v865 = vld [vmem:[#allocation9 + $0xc] sm:$0xf]
      %v866 = vld [vmem:[#allocation9 + $0x10] sm:$0xf]
      %v867 = vld [vmem:[#allocation9 + $0x14] sm:$0xf]
      %v868 = vld [vmem:[#allocation9 + $0x18] sm:$0xf]
      %v869 = vld [vmem:[#allocation9 + $0x1c] sm:$0xf]
      %v870 = vld [vmem:[#allocation9 + $0x20] sm:$0xf]
      %v871 = vld [vmem:[#allocation9 + $0x24] sm:$0xf]
      %v872 = vld [vmem:[#allocation9 + $0x28] sm:$0xf]
      %v873 = vld [vmem:[#allocation9 + $0x2c] sm:$0xf]
      %v874 = vld [vmem:[#allocation9 + $0x30] sm:$0xf]
      %v875 = vld [vmem:[#allocation9 + $0x34] sm:$0xf]
      %v876 = vld [vmem:[#allocation9 + $0x38] sm:$0xf]
      %v877 = vld [vmem:[#allocation9 + $0x3c] sm:$0xf]
      %v878 = vld [vmem:[%s6] sm:$0x1]
      %v880 = vlaneseq
      %v881 = vshrl.u32 %v880, 7
      %v882 = vsub.s32 0, %v881
      %v883 = vrot.slane %v878, %v882
      %v901 = vunpack.c.l.b16 %v862
      %v902 = vunpack.c.l.b16 %v863
      %v903 = vunpack.c.l.b16 %v864
      %v904 = vunpack.c.l.b16 %v865
      %v905 = vunpack.c.l.b16 %v866
      %v906 = vunpack.c.l.b16 %v867
      %v907 = vunpack.c.l.b16 %v868
      %v908 = vunpack.c.l.b16 %v869
      %v909 = vunpack.c.l.b16 %v870
      %v910 = vunpack.c.l.b16 %v871
      %v911 = vunpack.c.l.b16 %v872
      %v912 = vunpack.c.l.b16 %v873
      %v913 = vunpack.c.l.b16 %v874
      %v914 = vunpack.c.l.b16 %v875
      %v915 = vunpack.c.l.b16 %v876
      %v916 = vunpack.c.l.b16 %v877
      %v917 = vpack.c.b16 %v902, %v901
      %v918 = vpack.c.b16 %v904, %v903
      %v919 = vpack.c.b16 %v906, %v905
      %v920 = vpack.c.b16 %v908, %v907
      %v921 = vpack.c.b16 %v910, %v909
      %v922 = vpack.c.b16 %v912, %v911
      %v923 = vpack.c.b16 %v914, %v913
      %v924 = vpack.c.b16 %v916, %v915
      %933 = vmatprep.subr.bf16.mxu0 0
      %934 = vmatpush1.bf16.msra.mxu0 %v917
      %935 = vmatprep.subr.bf16.mxu0 0
      %936 = vmatpush1.bf16.msra.mxu0 %v918
      %937 = vmatprep.subr.bf16.mxu0 0
      %938 = vmatpush1.bf16.msra.mxu0 %v919
      %939 = vmatprep.subr.bf16.mxu0 0
      %940 = vmatpush1.bf16.msra.mxu0 %v920
      %941 = vmatprep.subr.bf16.mxu0 0
      %942 = vmatpush1.bf16.msra.mxu0 %v921
      %943 = vmatprep.subr.bf16.mxu0 0
      %944 = vmatpush1.bf16.msra.mxu0 %v922
      %945 = vmatprep.subr.bf16.mxu0 0
      %946 = vmatpush1.bf16.msra.mxu0 %v923
      %947 = vmatprep.subr.bf16.mxu0 0
      %948 = vmatpush1.bf16.msra.mxu0 %v924
      %949 = vmatprep.subr.bf16.mxu0 0
      %950 = vmatpush1.bf16.msra.mxu0 0
      %951 = vmatprep.subr.bf16.mxu0 0
      %952 = vmatpush1.bf16.msra.mxu0 0
      %953 = vmatprep.subr.bf16.mxu0 0
      %954 = vmatpush1.bf16.msra.mxu0 0
      %955 = vmatprep.subr.bf16.mxu0 0
      %956 = vmatpush1.bf16.msra.mxu0 0
      %957 = vmatprep.subr.bf16.mxu0 0
      %958 = vmatpush1.bf16.msra.mxu0 0
      %959 = vmatprep.subr.bf16.mxu0 0
      %960 = vmatpush1.bf16.msra.mxu0 0
      %961 = vmatprep.subr.bf16.mxu0 0
      %962 = vmatpush1.bf16.msra.mxu0 0
      %963 = vmatprep.subr.bf16.mxu0 0
      %964 = vmatpush1.bf16.msra.mxu0 0
      %965 = vmatprep.mubr.bf16.mxu0 0
      %966 = vmatmul.mubr.bf16.gmra.mrb[0].mxu0 %v861
      %v967 = vpop.f32.mrb[0].mxu0
      %v968 = vadd.f32 %v883, %v967
      %v969 = vpop.f32.mrb[0].mxu0
      %v970 = vpop.f32.mrb[0].mxu0
      %v971 = vadd.f32 %v883, %v970
      %v972 = vpop.f32.mrb[0].mxu0
      %973 = vdwg.mxu0
      %974 = vst [vmem:[#allocation11] sm:$0xff] %v968
      %975 = vst [vmem:[#allocation11 + $0x8] sm:$0xff] %v971
    $region53: #{tpu_custom_call.1} parent=1 // pred_fallthru
      _
    // Predicated region
    $region54: #{tpu_custom_call.1} parent=1 // pred_check
      _
    $region55: #{tpu_custom_call.1} parent=1 // pred_check_branch
      %977 = sbr.rel (0) target = $region57
    $region56: #{tpu_custom_call.1} parent=1 // pred_region
      %s979 = ssub.s32 256, 256
      %980 = vsyncadd [#allocation5], %s979
      %s981 = sshll.u32 [#allocation11], 4
      %s982 = int_to_ptr.vmem [resolvable:$true] %s981
      %987 = dma.vmem_to_hbm [thread:$0]  %s982, 256, %s7, [#allocation5], 128, 128, 8
    $region57: #{tpu_custom_call.1} parent=1 // pred_fallthru
      _
    // Predicated region
    $region58: #{tpu_custom_call.1} parent=1 // pred_check
      _
    $region59: #{tpu_custom_call.1} parent=1 // pred_check_branch
      %989 = sbr.rel (0) target = $region61
    $region60: #{tpu_custom_call.1} parent=1 // pred_region
      %990 = dma.done [#allocation5], 256
    $region61: #{tpu_custom_call.1} parent=1 // pred_fallthru
      _
    %991 = vsyncpa [#allocation4], 1
    %992 = vsyncpa [#allocation7], 1
    %993 = vsyncpa [#allocation10], 1
    %994 = vsyncpa [#allocation5], 1

</llo_original>
